<compile_context>
chip_gen: v5e
topology: v5e:2x2
jax: 0.10.0
libtpu: 0.0.40
codegen_flags: <defaults>
</compile_context>

<pallas_src>
import jax
import jax.numpy as jnp
from jax.experimental import pallas as pl
from jax.experimental.pallas import tpu as pltpu

F = 20  # nn.Linear(20, 20) fixes the feature dimension


def fancy_mlp_kernel(x_ref, p_ref, out_ref):
    x = x_ref[...]                               # (B, 20) f32

    # Packed params: rows [0:20]=M1, [20]=b1, [21:41]=W^T, [41]=b
    m1 = p_ref[0:F, :]                           # (20, 20) = W^T @ rand_weight
    b1 = p_ref[F:F + 1, :]                       # (1, 20)  = b @ rand_weight + 1
    wt = p_ref[F + 1:2 * F + 1, :]               # (20, 20) = W^T
    b2 = p_ref[2 * F + 1:2 * F + 2, :]           # (1, 20)  = b

    # relu((x @ W^T + b) @ rw + 1)  ==  relu(x @ M1 + b1)   (folded offline)
    h = jnp.maximum(jnp.dot(x, m1, preferred_element_type=jnp.float32) + b1, 0.0)
    # shared linear, second application
    h = jnp.dot(h, wt, preferred_element_type=jnp.float32) + b2

    # Issue both cross-lane reductions adjacently (second hides under first).
    sum_h = jnp.sum(h)
    ss = jnp.sum(h * h)

    # Closed-form replacement for `while ||h|| > 1: h /= 2`:
    # number of halvings k = max(ceil(log2(nrm)), 0); scale = 2^-k.
    nrm = jnp.sqrt(ss)
    k = jnp.maximum(jnp.ceil(jnp.log2(nrm)), 0.0)
    scale = jnp.exp2(-k)
    # if ||h|| < 0.8 after halving: h *= 10
    scale = jnp.where(nrm * scale < 0.8, scale * 10.0, scale)

    out_ref[0] = sum_h * scale


def fancy_mlp_init_params(w, b, rand_weight):
    """One-time parameter prep (do NOT run per call):
    transpose, fold the first two matmuls, and pack everything into one array."""
    wt = jnp.transpose(w).astype(jnp.float32)                   # (in, out)
    rw = rand_weight.astype(jnp.float32)
    bf = b.astype(jnp.float32)
    m1 = jnp.dot(wt, rw, preferred_element_type=jnp.float32)    # (20, 20)
    b1 = jnp.dot(bf, rw, preferred_element_type=jnp.float32) + 1.0  # (20,)
    params = jnp.concatenate(
        [m1, b1.reshape(1, F), wt, bf.reshape(1, F)], axis=0)   # (42, 20)
    return params.astype(jnp.float32)


@jax.jit
def fancy_mlp(x, params):
    """x: (B, 20) f32; params: (42, 20) f32 from fancy_mlp_init_params."""
    out = pl.pallas_call(
        fancy_mlp_kernel,
        out_shape=jax.ShapeDtypeStruct((1,), jnp.float32),
        in_specs=[
            pl.BlockSpec(memory_space=pltpu.MemorySpace.VMEM),  # x
            pl.BlockSpec(memory_space=pltpu.MemorySpace.VMEM),  # packed params
        ],
        out_specs=pl.BlockSpec(memory_space=pltpu.MemorySpace.SMEM),
    )(x, params)
    return out[0]


def _reference(x, w, b, rand_weight):
    """Pure-JAX reference following the original (unfolded) PyTorch order."""
    h = x @ w.T + b
    h = jnp.maximum(h @ rand_weight + 1.0, 0.0)
    h = h @ w.T + b
    nrm = float(jnp.sqrt(jnp.sum(h * h)))
    while nrm > 1.0:
        h = h / 2.0
        nrm = float(jnp.sqrt(jnp.sum(h * h)))
    if nrm < 0.8:
        h = h * 10.0
    return float(jnp.sum(h))


if __name__ == "__main__":
    B = 2

    key = jax.random.PRNGKey(0)
    kx, kw, kb, kr = jax.random.split(key, 4)

    x = jax.random.normal(kx, (B, F), dtype=jnp.float32)

    # nn.Linear default init: U(-1/sqrt(in), 1/sqrt(in))
    bound = 1.0 / jnp.sqrt(jnp.float32(F))
    w = jax.random.uniform(kw, (F, F), jnp.float32, -bound, bound)   # (out, in)
    b = jax.random.uniform(kb, (F,), jnp.float32, -bound, bound)

    # torch.rand((20, 20)): U[0, 1)
    rand_weight = jax.random.uniform(kr, (F, F), jnp.float32, 0.0, 1.0)

    params = jax.block_until_ready(fancy_mlp_init_params(w, b, rand_weight))

    result = jax.block_until_ready(fancy_mlp(x, params))
    assert result.shape == () and result.dtype == jnp.float32

    ref = _reference(x, w, b, rand_weight)
    assert abs(float(result) - ref) <= 1e-3 * max(1.0, abs(ref)), (float(result), ref)

    print("KERNEL_OK")
</pallas_src>

<mosaic_0001>
module attributes {stable_mosaic.version = 11 : i64} {
  func.func @fancy_mlp_kernel(%arg0: memref<2x20xf32, #tpu.memory_space<vmem>>, %arg1: memref<42x20xf32, #tpu.memory_space<vmem>>, %arg2: memref<1xf32, #tpu.memory_space<smem>>) attributes {dimension_semantics = [], scalar_prefetch = 0 : i64, scratch_operands = 0 : i64, tpu.core_type = #tpu.core_type<tc>} {
    %c0 = arith.constant 0 : index
    %c0_0 = arith.constant 0 : index
    %0 = vector.load %arg0[%c0, %c0_0] : memref<2x20xf32, #tpu.memory_space<vmem>>, vector<2x20xf32>
    %c0_1 = arith.constant 0 : index
    %c0_2 = arith.constant 0 : index
    %1 = vector.load %arg1[%c0_1, %c0_2] : memref<42x20xf32, #tpu.memory_space<vmem>>, vector<20x20xf32>
    %c20 = arith.constant 20 : index
    %c0_3 = arith.constant 0 : index
    %2 = vector.load %arg1[%c20, %c0_3] : memref<42x20xf32, #tpu.memory_space<vmem>>, vector<1x20xf32>
    %c21 = arith.constant 21 : index
    %c0_4 = arith.constant 0 : index
    %3 = vector.load %arg1[%c21, %c0_4] : memref<42x20xf32, #tpu.memory_space<vmem>>, vector<20x20xf32>
    %c41 = arith.constant 41 : index
    %c0_5 = arith.constant 0 : index
    %4 = vector.load %arg1[%c41, %c0_5] : memref<42x20xf32, #tpu.memory_space<vmem>>, vector<1x20xf32>
    %cst = arith.constant dense<0.000000e+00> : vector<2x20xf32>
    %5 = tpu.matmul %0, %1, %cst {dimension_numbers = #tpu.dot_dimension_numbers<[1], [0], [0], [1], [0, 0, 1, 1], [], []>} : vector<2x20xf32>, vector<20x20xf32>, vector<2x20xf32> -> vector<2x20xf32>
    %6 = vector.broadcast %2 : vector<1x20xf32> to vector<2x20xf32>
    %7 = arith.addf %5, %6 : vector<2x20xf32>
    %cst_6 = arith.constant 0.000000e+00 : f32
    %8 = vector.broadcast %cst_6 : f32 to vector<2x20xf32>
    %9 = arith.maximumf %7, %8 : vector<2x20xf32>
    %cst_7 = arith.constant dense<0.000000e+00> : vector<2x20xf32>
    %10 = tpu.matmul %9, %3, %cst_7 {dimension_numbers = #tpu.dot_dimension_numbers<[1], [0], [0], [1], [0, 0, 1, 1], [], []>} : vector<2x20xf32>, vector<20x20xf32>, vector<2x20xf32> -> vector<2x20xf32>
    %11 = vector.broadcast %4 : vector<1x20xf32> to vector<2x20xf32>
    %12 = arith.addf %10, %11 : vector<2x20xf32>
    %13 = vector.shape_cast %12 : vector<2x20xf32> to vector<1x2x20xf32>
    %cst_8 = arith.constant dense<0.000000e+00> : vector<1xf32>
    %14 = vector.multi_reduction <add>, %13, %cst_8 [1, 2] : vector<1x2x20xf32> to vector<1xf32>
    %15 = vector.shape_cast %14 : vector<1xf32> to vector<1x1x1xf32>
    %16 = vector.extract %15[0, 0, 0] : f32 from vector<1x1x1xf32>
    %17 = arith.mulf %12, %12 : vector<2x20xf32>
    %18 = vector.shape_cast %17 : vector<2x20xf32> to vector<1x2x20xf32>
    %cst_9 = arith.constant dense<0.000000e+00> : vector<1xf32>
    %19 = vector.multi_reduction <add>, %18, %cst_9 [1, 2] : vector<1x2x20xf32> to vector<1xf32>
    %20 = vector.shape_cast %19 : vector<1xf32> to vector<1x1x1xf32>
    %21 = vector.extract %20[0, 0, 0] : f32 from vector<1x1x1xf32>
    %22 = math.sqrt %21 : f32
    %23 = math.log %22 : f32
    %cst_10 = arith.constant 2.000000e+00 : f32
    %24 = math.log %cst_10 : f32
    %25 = arith.divf %23, %24 : f32
    %26 = math.ceil %25 : f32
    %cst_11 = arith.constant 0.000000e+00 : f32
    %27 = arith.maximumf %26, %cst_11 : f32
    %cst_12 = arith.constant 0.000000e+00 : f32
    %28 = arith.subf %cst_12, %27 : f32
    %29 = math.exp2 %28 : f32
    %30 = arith.mulf %22, %29 : f32
    %cst_13 = arith.constant 8.000000e-01 : f32
    %31 = arith.cmpf olt, %30, %cst_13 : f32
    %cst_14 = arith.constant 1.000000e+01 : f32
    %32 = arith.mulf %29, %cst_14 : f32
    %33 = arith.select %31, %32, %29 : f32
    %34 = arith.mulf %16, %33 : f32
    %c0_15 = arith.constant 0 : index
    %35 = memref.load %arg2[%c0_15] : memref<1xf32, #tpu.memory_space<smem>>
    memref.store %34, %arg2[%c0_15] : memref<1xf32, #tpu.memory_space<smem>>
    return
  }
}

</mosaic_0001>

<llo_original>
// kernel: fancy_mlp.1
$region0: #{fancy_mlp.1}
  #allocation0 [shape = 'u32[]', space=smem, size = 0x4, offset = 0x4, fixed_abs, tag = 'smem constant byte address 0x4 - core index']
  #allocation1 [shape = 'u32[72,128]{1,0:T(1,128)}', space=vmem, size = 0x9000, scoped, tag = 'internal scratch']
  %s0 = inlined_call_operand.vmem [shape: f32[2,20], index: 0, kind: input, shape index: {}]
  %s1 = inlined_call_operand.vmem [shape: f32[42,20], index: 1, kind: input, shape index: {}]
  %s2 = inlined_call_operand.hbm [shape: f32[1], index: 2, kind: output, shape index: {}]
  %s3 = sld [smem:[#allocation0]]
  $region18: #{fancy_mlp.1} parent=0
    _
  %s5 = ssub.s32 1, %s3
  %s6 = scalar_select 0, %s5, %s3
  $region1: #{fancy_mlp.1} parent=0
    #allocation2 [shape = 'u8[512]{0}', space=smem, size = 0x200, scoped, tag = 'output window, operand 0, single buffered']
    #allocation3 [shape = 's32[1]{0}', space=sflag, size = 0x4, scoped, tag = 'scoped memory for fancy_mlp.1']
    %7 = vsyncpa [#allocation3], 0
    // Predicated region
    $region2: #{fancy_mlp.1} parent=1 // pred_check
      _
    $region3: #{fancy_mlp.1} parent=1 // pred_check_branch
      %9 = sbr.rel (0) target = $region5
    $region4: #{fancy_mlp.1} parent=1 // pred_region
      _
    $region5: #{fancy_mlp.1} parent=1 // pred_fallthru
      _
    // Predicated region
    $region6: #{fancy_mlp.1} parent=1 // pred_check
      _
    $region7: #{fancy_mlp.1} parent=1 // pred_check_branch
      %11 = sbr.rel (0) target = $region9
    $region8: #{fancy_mlp.1} parent=1 // pred_region
      _
    $region9: #{fancy_mlp.1} parent=1 // pred_fallthru
      _
    %v12 = vld [vmem:[%s0] sm:$0x3]
    %v13 = vld [vmem:[%s1] sm:$0xff]
    %v14 = vld [vmem:[%s1 + $0x8] sm:$0xff]
    %v15 = vld [vmem:[%s1 + $0x10] sm:$0xf]
    %v16 = vld [vmem:[%s1 + $0x14] sm:$0x1]
    %v17 = vld [vmem:[%s1 + $0x15] sm:$0xff]
    %v18 = vld [vmem:[%s1 + $0x1d] sm:$0xff]
    %v19 = vld [vmem:[%s1 + $0x25] sm:$0xf]
    %v20 = vld [vmem:[%s1 + $0x29] sm:$0x1]
    %v21 = vperm.slane %v16, 0
    %vm22 = vcmask 162816
    %v24 = vsel %vm22, %v12, 0
    %vm26 = vcmask 1043456
    %v28 = vsel %vm26, %v15, 0
    %30 = vmatpush.msra.mxu0 0.0
    %31 = vmatpush.msra.mxu0 0.0
    %32 = vmatpush.msra.mxu0 0.0
    %33 = vmatpush.msra.mxu0 0.0
    %34 = vmatpush.msra.mxu0 0.0
    %35 = vmatpush.msra.mxu0 0.0
    %36 = vmatpush.msra.mxu0 0.0
    %37 = vmatpush.msra.mxu0 0.0
    %38 = vmatpush.msra.mxu0 0.0
    %39 = vmatpush.msra.mxu0 0.0
    %40 = vmatpush.msra.mxu0 0.0
    %41 = vmatpush.msra.mxu0 0.0
    %42 = vmatpush.msra.mxu0 0.0
    %43 = vmatpush.msra.mxu0 %v28
    %44 = vmatpush.msra.mxu0 %v14
    %45 = vmatpush.msra.mxu0 %v13
    %46 = vmatmul.f32.gmra.mxu0 %v24
    %v47 = vpop.f32.mrf.mxu0
    %v48 = vadd.f32 %v21, %v47
    %49 = vdwg.mxu0
    %v50 = vmax.f32 %v48, 0.0
    %v51 = vperm.slane %v20, 0
    %v53 = vsel %vm22, %v50, 0
    %v56 = vsel %vm26, %v19, 0
    %58 = vmatpush.msra.mxu0 0.0
    %59 = vmatpush.msra.mxu0 0.0
    %60 = vmatpush.msra.mxu0 0.0
    %61 = vmatpush.msra.mxu0 0.0
    %62 = vmatpush.msra.mxu0 0.0
    %63 = vmatpush.msra.mxu0 0.0
    %64 = vmatpush.msra.mxu0 0.0
    %65 = vmatpush.msra.mxu0 0.0
    %66 = vmatpush.msra.mxu0 0.0
    %67 = vmatpush.msra.mxu0 0.0
    %68 = vmatpush.msra.mxu0 0.0
    %69 = vmatpush.msra.mxu0 0.0
    %70 = vmatpush.msra.mxu0 0.0
    %71 = vmatpush.msra.mxu0 %v56
    %72 = vmatpush.msra.mxu0 %v18
    %73 = vmatpush.msra.mxu0 %v17
    %74 = vmatmul.f32.gmra.mxu0 %v53
    %v75 = vpop.f32.mrf.mxu0
    %v76 = vadd.f32 %v51, %v75
    %77 = vdwg.mxu0
    %vm78 = vcmask 156672
    %v79 = vsel %vm78, %v76, 0.0
    %80 = vadd.xlane.f32.xlu0 %v79
    %v81 = vpop.xlane.xlu0 %80
    %v82 = vrot.slane %v81, 4
    %v83 = vadd.f32 %v81, %v82
    %v84 = vrot.slane %v83, 2
    %v85 = vadd.f32 %v83, %v84
    %v86 = vrot.slane %v85, 1
    %v87 = vadd.f32 %v85, %v86
    %s88 = vtos %v87
    %v89 = vmul.f32 %v76, %v76
    %v90 = vsel %vm78, %v89, 0.0
    %91 = vadd.xlane.f32.xlu0 %v90
    %v92 = vpop.xlane.xlu0 %91
    %v93 = vrot.slane %v92, 4
    %v94 = vadd.f32 %v92, %v93
    %v95 = vrot.slane %v94, 2
    %v96 = vadd.f32 %v94, %v95
    %v97 = vrot.slane %v96, 1
    %v98 = vadd.f32 %v96, %v97
    %s99 = vtos %v98
    %v100 = vstv %s99
    %v101 = vrsqrt.pop %v100
    %v102 = vmul.f32 %v101, %v100
    %v103 = vmul.f32 %v102, %v101
    %v104 = vmul.f32 0.5, %v103
    %v105 = vsub.f32 1.5, %v104
    %v106 = vmul.f32 %v101, %v105
    %v107 = vmul.f32 %v100, %v106
    %vm108 = vcmp.eq.f32.partialorder %v100, inf
    %v109 = vsel %vm108, %v100, %v107
    %vm110 = vcmp.eq.f32.partialorder %v100, 0.0
    %v111 = vand.u32 %v100, 2147483648
    %v112 = vsel %vm110, %v111, %v109
    %s113 = vtos %v112
    %v114 = vstv %s113
    %v115 = vlog2.pop %v114
    %v116 = vmul.f32 %v115, 0.6931472
    %s117 = vtos %v116
    %v118 = vrcp.pop 0.6931472
    %v119 = vmul.f32 0.6931472, %v118
    %v120 = vsub.f32 1.0, %v119
    %v121 = vmul.f32 %v118, %v120
    %v122 = vadd.f32 %v118, %v121
    %vm123 = vweird.f32 %v118
    %v124 = vsel %vm123, %v118, %v122
    %s125 = vtos %v124
    %s126 = smul.f32 %s117, %s125
    %s127 = sceil.f32 %s126
    %s128 = smax.f32 %s127, 0.0
    %s129 = ssub.f32 0.0, %s128
    %v130 = vstv %s129
    %v131 = vpow.pop %v130
    %s132 = vtos %v131
    %s133 = smul.f32 %s113, %s132
    %p134 = scmp.lt.f32.partialorder %s133, 0.8
    %s135 = smul.f32 %s132, 10.0
    %s136 = scalar_select %p134, %s135, %s132
    %s137 = smul.f32 %s88, %s136
    %s138 = scalar_lea.smem [#allocation2], 0
    %139 = sst [smem:[%s138]] %s137
    // Predicated region
    $region10: #{fancy_mlp.1} parent=1 // pred_check
      _
    $region11: #{fancy_mlp.1} parent=1 // pred_check_branch
      %141 = sbr.rel (0) target = $region13
    $region12: #{fancy_mlp.1} parent=1 // pred_region
      %143 = vsyncadd [#allocation3], 0
      %s145 = sshll.u32 %s2, 4
      %s146 = int_to_ptr.hbm [resolvable:$true] %s145
      %148 = dma.smem_to_hbm [#allocation2], 16, %s146, [#allocation3]
    $region13: #{fancy_mlp.1} parent=1 // pred_fallthru
      _
    // Predicated region
    $region14: #{fancy_mlp.1} parent=1 // pred_check
      _
    $region15: #{fancy_mlp.1} parent=1 // pred_check_branch
      %150 = sbr.rel (0) target = $region17
    $region16: #{fancy_mlp.1} parent=1 // pred_region
      %152 = dma.done [#allocation3], 16
    $region17: #{fancy_mlp.1} parent=1 // pred_fallthru
      _
    %153 = sfence
    %154 = vsyncpa [#allocation3], 1

</llo_original>
